<compile_context>
chip_gen: v7x
topology: tpu7x:2x2x1
jax: 0.10.0
libtpu: 0.0.40
codegen_flags: <defaults>
</compile_context>

<pallas_src>
import numpy as np
import jax
import jax.numpy as jnp
from jax.experimental import pallas as pl
from jax.experimental.pallas import tpu as pltpu

HIDDEN = 32
NUM_CLASSES = 4


# ----------------------------- Pallas kernels -----------------------------

def _model_kernel(p_ref, w1_ref, b1_ref, w2_ref, b2_ref, out_ref):
    # p_ref : (9, BM) bf16 im2col patches (lane dim = flattened batch*H*W chunk)
    # w1_ref: (HIDDEN, 9) bf16, b1_ref: (HIDDEN, 1) f32
    # w2_ref: (C, HIDDEN) bf16, b2_ref: (C, 1) f32
    # out   : (C, BM) f32 logits (lane-dense output -> unmasked stores)
    p = p_ref[...]
    h = jnp.dot(w1_ref[...], p, preferred_element_type=jnp.float32)        # (HIDDEN, BM)
    h = jnp.maximum(h + b1_ref[...], 0.0)                                   # bias + ReLU, f32
    logits = jnp.dot(w2_ref[...], h.astype(jnp.bfloat16),
                     preferred_element_type=jnp.float32)                    # (C, BM)
    out_ref[...] = logits + b2_ref[...]


def model_forward(patches, w1t, b1, w2t, b2):
    """Synthetic segmentation model: Conv3x3(1->HIDDEN, pad=1)+ReLU, Conv1x1(HIDDEN->C).

    patches: (9, M) bf16 with M = total_pixels (lane axis).
    Returns (C, M) f32 logits.
    """
    taps, m = patches.shape
    hidden = w1t.shape[0]
    c_out = w2t.shape[0]

    # 2-way split along the lane axis (marked "parallel") so v7x's two TensorCores both
    # get work; on v5e/v6e this is just two cheap grid steps.  Fall back to one block if
    # the split would violate the 128-lane divisibility rule.
    n_blocks = 2 if (m % 256 == 0) else 1
    bm = m // n_blocks
    # TODO(synk): for production image sizes, tile bm (~4096-8192) and set vmem_limit_bytes
    # so the double-buffered working set stays under v7x's 64 MiB VMEM.

    return pl.pallas_call(
        _model_kernel,
        out_shape=jax.ShapeDtypeStruct((c_out, m), jnp.float32),
        grid_spec=pltpu.PrefetchScalarGridSpec(
            num_scalar_prefetch=0,
            grid=(n_blocks,),
            in_specs=[
                pl.BlockSpec((taps, bm), lambda i: (0, i)),
                pl.BlockSpec((hidden, taps), lambda i: (0, 0)),
                pl.BlockSpec((hidden, 1), lambda i: (0, 0)),
                pl.BlockSpec((c_out, hidden), lambda i: (0, 0)),
                pl.BlockSpec((c_out, 1), lambda i: (0, 0)),
            ],
            out_specs=pl.BlockSpec((c_out, bm), lambda i: (0, i)),
        ),
        compiler_params=pltpu.CompilerParams(dimension_semantics=("parallel",)),
    )(patches, w1t, b1, w2t, b2)


def _sum_softmax_kernel(a_ref, b_ref, o_ref):
    # a_ref, b_ref: (N, C, H*W) f32 — add the two (inverse-transformed) model outputs
    # and softmax over the class dim (axis=1), matching `F.softmax(final_output, dim=1)`.
    s = a_ref[...] + b_ref[...]
    m = jnp.max(s, axis=1, keepdims=True)
    e = jnp.exp(s - m)
    denom = jnp.sum(e, axis=1, keepdims=True)
    o_ref[...] = e * pl.reciprocal(denom, approx=False)


def sum_softmax(a, b):
    """a, b: (N, C, H, W) f32 -> softmax(a + b, dim=1), same shape."""
    n, c, h, w = a.shape
    hw = h * w
    a2 = a.reshape(n, c, hw).astype(jnp.float32)
    b2 = b.reshape(n, c, hw).astype(jnp.float32)
    out = pl.pallas_call(
        _sum_softmax_kernel,
        out_shape=jax.ShapeDtypeStruct((n, c, hw), jnp.float32),
        grid_spec=pltpu.PrefetchScalarGridSpec(
            num_scalar_prefetch=0,
            grid=(1,),
            in_specs=[
                pl.BlockSpec((n, c, hw), lambda i: (0, 0, 0)),
                pl.BlockSpec((n, c, hw), lambda i: (0, 0, 0)),
            ],
            out_specs=pl.BlockSpec((n, c, hw), lambda i: (0, 0, 0)),
        ),
        compiler_params=pltpu.CompilerParams(dimension_semantics=("arbitrary",)),
    )(a2, b2)
    return out.reshape(n, c, h, w)


# ------------------------------- JAX glue ---------------------------------

def im2col_3x3(x):
    """(B, H, W) single-channel -> (9, B*H*W) lane-dense patches for 3x3 conv, pad=1."""
    b, h, w = x.shape
    xp = jnp.pad(x, ((0, 0), (1, 1), (1, 1)))
    cols = [xp[:, dh:dh + h, dw:dw + w] for dh in range(3) for dw in range(3)]
    return jnp.stack(cols, axis=0).reshape(9, b * h * w)


def nn_rotate(img, angle_deg, axes):
    """Nearest-neighbor rotation: scipy.ndimage.rotate(order=0, reshape=False, cval=0)."""
    # TODO(synk): approximates scipy's exact spline-order-0 boundary handling with
    # round-half-up + bounds masking (pure data movement / gather -> kept in JAX glue).
    ndim = img.ndim
    a0, a1 = sorted(ax % ndim for ax in axes)          # scipy sorts the plane axes
    perm = [i for i in range(ndim) if i not in (a0, a1)] + [a0, a1]
    xp = jnp.transpose(img, perm)
    n0, n1 = xp.shape[-2], xp.shape[-1]
    rad = np.deg2rad(float(angle_deg))
    c, s = np.cos(rad), np.sin(rad)
    i0 = jnp.arange(n0, dtype=jnp.float32).reshape(n0, 1)
    i1 = jnp.arange(n1, dtype=jnp.float32).reshape(1, n1)
    c0, c1 = (n0 - 1) / 2.0, (n1 - 1) / 2.0
    # scipy: input_coord = rot_matrix @ (output_coord - center) + center,
    #        rot_matrix = [[cos, sin], [-sin, cos]]
    src0 = c * (i0 - c0) + s * (i1 - c1) + c0
    src1 = -s * (i0 - c0) + c * (i1 - c1) + c1
    r0 = jnp.floor(src0 + 0.5).astype(jnp.int32)
    r1 = jnp.floor(src1 + 0.5).astype(jnp.int32)
    valid = (r0 >= 0) & (r0 < n0) & (r1 >= 0) & (r1 < n1)
    r0c = jnp.clip(r0, 0, n0 - 1)
    r1c = jnp.clip(r1, 0, n1 - 1)
    gathered = xp[..., r0c, r1c]                       # (..., n0, n1)
    out = jnp.where(valid, gathered, jnp.zeros((), img.dtype))
    return jnp.transpose(out, np.argsort(perm))


def de_framework_augmenting_forward(img, valid_mask, params, aug):
    """Mirrors DE_framework_Augmenting.forward -> weighted_avg."""
    w1t, b1, w2t, b2 = params
    k_rot, flip_axis, angle = aug

    x = img[np.asarray(valid_mask)]                    # x = img[valid_mask], (N, H, W)
    n, h, w = x.shape
    assert h == w, "reference rot90 augmentation requires square slices"

    # random_rot_flip (deterministic k / axis in this synthetic setting)
    xt = jnp.transpose(x, (1, 2, 0))
    xt = jnp.rot90(xt, k_rot)
    xt = jnp.flip(xt, axis=flip_axis)
    x_rot_flip = jnp.transpose(xt, (2, 0, 1))

    # random_rotate: ndimage.rotate default axes=(1, 0) -> rotation plane = axes (0, 1)
    # (reproduced as written in the reference, even though it spans the batch dim —
    # this mixes pixels across slices exactly like the reference code does)
    x_rotate = nn_rotate(x, angle, axes=(1, 0))

    x_aug = jnp.concatenate([x_rot_flip, x_rotate], axis=0).astype(jnp.float32)  # (2N,H,W)

    # model forward on both augmented batches in ONE lane-dense Pallas call:
    # patches (9, 2N*H*W) bf16 -> logits (C, 2N*H*W) f32
    patches = im2col_3x3(x_aug).astype(jnp.bfloat16)
    logits = model_forward(patches, w1t, b1, w2t, b2)
    logits = logits.reshape(NUM_CLASSES, 2 * n, h, w)
    logits = jnp.transpose(logits, (1, 0, 2, 3))       # NCHW: (2N, C, H, W)

    rot_flip_out = logits[:n]
    rotate_out = logits[n:]

    # inverse_random_rot_flip: only the rotation is undone (the flip is NOT inverted),
    # exactly as in the reference implementation.
    rot_flip_out = jnp.rot90(rot_flip_out, 4 - k_rot, axes=(2, 3))
    # inverse_random_rotate: rotate by -angle in plane (2, 3)
    rotate_out = nn_rotate(rotate_out, -angle, axes=(2, 3))

    # final accumulation + softmax over classes (Pallas kernel).
    # TODO(synk): reference accumulates/softmaxes in float64 (numpy default); float32 here.
    return sum_softmax(rot_flip_out, rotate_out)


# --------------------------------- main ------------------------------------

if __name__ == "__main__":
    key = jax.random.PRNGKey(0)
    k_img, k_k, k_ax, k_ang, k_w = jax.random.split(key, 5)

    B, H, W = 4, 16, 16
    img = jax.random.normal(k_img, (B, H, W), jnp.float32)
    valid_mask = np.array([True, False, True, True])   # 3 valid slices

    # deterministic stand-ins for the reference's np.random augmentation draws
    k_rot = int(jax.random.randint(k_k, (), 0, 4))
    flip_axis = int(jax.random.randint(k_ax, (), 0, 2))
    angle = int(jax.random.randint(k_ang, (), -20, 20))

    # deterministic synthetic model parameters (stored transposed / lane-dense)
    kw1, kb1, kw2, kb2 = jax.random.split(k_w, 4)
    w1t = (0.1 * jax.random.normal(kw1, (HIDDEN, 9), jnp.float32)).astype(jnp.bfloat16)
    b1 = 0.1 * jax.random.normal(kb1, (HIDDEN, 1), jnp.float32)
    w2t = (0.1 * jax.random.normal(kw2, (NUM_CLASSES, HIDDEN), jnp.float32)).astype(jnp.bfloat16)
    b2 = 0.1 * jax.random.normal(kb2, (NUM_CLASSES, 1), jnp.float32)

    out = de_framework_augmenting_forward(
        img, valid_mask, (w1t, b1, w2t, b2), (k_rot, flip_axis, angle))
    out = jax.block_until_ready(out)

    n_valid = int(np.asarray(valid_mask).sum())
    assert out.shape == (n_valid, NUM_CLASSES, H, W), out.shape
    sums = np.asarray(jnp.sum(out, axis=1))
    assert np.allclose(sums, 1.0, atol=1e-5), "softmax over classes does not sum to 1"
    print("KERNEL_OK")
</pallas_src>

<mosaic_0001>
module attributes {stable_mosaic.version = 11 : i64} {
  func.func @_model_kernel(%arg0: i32, %arg1: memref<9x768xbf16, #tpu.memory_space<vmem>>, %arg2: memref<32x9xbf16, #tpu.memory_space<vmem>>, %arg3: memref<32x1xf32, #tpu.memory_space<vmem>>, %arg4: memref<4x32xbf16, #tpu.memory_space<vmem>>, %arg5: memref<4x1xf32, #tpu.memory_space<vmem>>, %arg6: memref<4x768xf32, #tpu.memory_space<vmem>>) attributes {dimension_semantics = [#tpu.dimension_semantics<parallel>], iteration_bounds = array<i64: 2>, scalar_prefetch = 0 : i64, scratch_operands = 0 : i64, tpu.core_type = #tpu.core_type<tc>, window_params = [{transform_indices = @transform_0, window_bounds = array<i64: 9, 768>}, {pipeline_mode = #tpu.pipeline_mode<synchronous>, transform_indices = @transform_1, window_bounds = array<i64: 32, 9>}, {pipeline_mode = #tpu.pipeline_mode<synchronous>, transform_indices = @transform_2, window_bounds = array<i64: 32, 1>}, {pipeline_mode = #tpu.pipeline_mode<synchronous>, transform_indices = @transform_3, window_bounds = array<i64: 4, 32>}, {pipeline_mode = #tpu.pipeline_mode<synchronous>, transform_indices = @transform_4, window_bounds = array<i64: 4, 1>}, {transform_indices = @transform_5, window_bounds = array<i64: 4, 768>}]} {
    %c0 = arith.constant 0 : index
    %c0_0 = arith.constant 0 : index
    %0 = vector.load %arg1[%c0, %c0_0] : memref<9x768xbf16, #tpu.memory_space<vmem>>, vector<9x768xbf16>
    %c0_1 = arith.constant 0 : index
    %c0_2 = arith.constant 0 : index
    %1 = vector.load %arg2[%c0_1, %c0_2] : memref<32x9xbf16, #tpu.memory_space<vmem>>, vector<32x9xbf16>
    %cst = arith.constant dense<0.000000e+00> : vector<32x768xf32>
    %2 = tpu.matmul %1, %0, %cst {dimension_numbers = #tpu.dot_dimension_numbers<[1], [0], [0], [1], [0, 0, 1, 1], [], []>} : vector<32x9xbf16>, vector<9x768xbf16>, vector<32x768xf32> -> vector<32x768xf32>
    %c0_3 = arith.constant 0 : index
    %c0_4 = arith.constant 0 : index
    %3 = vector.load %arg3[%c0_3, %c0_4] : memref<32x1xf32, #tpu.memory_space<vmem>>, vector<32x1xf32>
    %4 = vector.broadcast %3 : vector<32x1xf32> to vector<32x768xf32>
    %5 = arith.addf %2, %4 : vector<32x768xf32>
    %cst_5 = arith.constant 0.000000e+00 : f32
    %6 = vector.broadcast %cst_5 : f32 to vector<32x768xf32>
    %7 = arith.maximumf %5, %6 : vector<32x768xf32>
    %c0_6 = arith.constant 0 : index
    %c0_7 = arith.constant 0 : index
    %8 = vector.load %arg4[%c0_6, %c0_7] : memref<4x32xbf16, #tpu.memory_space<vmem>>, vector<4x32xbf16>
    %9 = arith.truncf %7 : vector<32x768xf32> to vector<32x768xbf16>
    %cst_8 = arith.constant dense<0.000000e+00> : vector<4x768xf32>
    %10 = tpu.matmul %8, %9, %cst_8 {dimension_numbers = #tpu.dot_dimension_numbers<[1], [0], [0], [1], [0, 0, 1, 1], [], []>} : vector<4x32xbf16>, vector<32x768xbf16>, vector<4x768xf32> -> vector<4x768xf32>
    %c0_9 = arith.constant 0 : index
    %c0_10 = arith.constant 0 : index
    %11 = vector.load %arg5[%c0_9, %c0_10] : memref<4x1xf32, #tpu.memory_space<vmem>>, vector<4x1xf32>
    %12 = vector.broadcast %11 : vector<4x1xf32> to vector<4x768xf32>
    %13 = arith.addf %10, %12 : vector<4x768xf32>
    %c0_11 = arith.constant 0 : index
    %c0_12 = arith.constant 0 : index
    %14 = vector.load %arg6[%c0_11, %c0_12] : memref<4x768xf32, #tpu.memory_space<vmem>>, vector<4x768xf32>
    tpu.vector_store %arg6[%c0_11, %c0_12], %13 {strides = array<i32>} : memref<4x768xf32, #tpu.memory_space<vmem>>, vector<4x768xf32>,
    return
  }
  func.func @transform_0(%arg0: i32) -> (i32, i32) {
    %c0_i32 = arith.constant 0 : i32
    %c0_i32_0 = arith.constant 0 : i32
    return %c0_i32, %arg0 : i32, i32
  }
  func.func @transform_1(%arg0: i32) -> (i32, i32) {
    %c0_i32 = arith.constant 0 : i32
    %c0_i32_0 = arith.constant 0 : i32
    %c0_i32_1 = arith.constant 0 : i32
    return %c0_i32, %c0_i32_0 : i32, i32
  }
  func.func @transform_2(%arg0: i32) -> (i32, i32) {
    %c0_i32 = arith.constant 0 : i32
    %c0_i32_0 = arith.constant 0 : i32
    %c0_i32_1 = arith.constant 0 : i32
    return %c0_i32, %c0_i32_0 : i32, i32
  }
  func.func @transform_3(%arg0: i32) -> (i32, i32) {
    %c0_i32 = arith.constant 0 : i32
    %c0_i32_0 = arith.constant 0 : i32
    %c0_i32_1 = arith.constant 0 : i32
    return %c0_i32, %c0_i32_0 : i32, i32
  }
  func.func @transform_4(%arg0: i32) -> (i32, i32) {
    %c0_i32 = arith.constant 0 : i32
    %c0_i32_0 = arith.constant 0 : i32
    %c0_i32_1 = arith.constant 0 : i32
    return %c0_i32, %c0_i32_0 : i32, i32
  }
  func.func @transform_5(%arg0: i32) -> (i32, i32) {
    %c0_i32 = arith.constant 0 : i32
    %c0_i32_0 = arith.constant 0 : i32
    return %c0_i32, %arg0 : i32, i32
  }
}

</mosaic_0001>

<llo_original>
// kernel: tpu_custom_call.1
$region0: #{tpu_custom_call.1}
  #allocation0 [shape = 'u32[]', space=smem, size = 0x4, offset = 0x4, fixed_abs, tag = 'smem constant byte address 0x4 - core index']
  #allocation1 [shape = 'u32[144,128]{1,0:T(1,128)}', space=vmem, size = 0x12000, scoped, tag = 'internal scratch']
  %s0 = inlined_call_operand.hbm [shape: bf16[9,1536], index: 0, kind: input, shape index: {}]
  %s1 = inlined_call_operand.vmem [shape: bf16[32,9], index: 1, kind: input, shape index: {}]
  %s2 = inlined_call_operand.vmem [shape: f32[32,1], index: 2, kind: input, shape index: {}]
  %s3 = inlined_call_operand.vmem [shape: bf16[4,32], index: 3, kind: input, shape index: {}]
  %s4 = inlined_call_operand.vmem [shape: f32[4,1], index: 4, kind: input, shape index: {}]
  %s5 = inlined_call_operand.hbm [shape: f32[4,1536], index: 5, kind: output, shape index: {}]
  %s6 = sld [smem:[#allocation0]]
  $region57: #{tpu_custom_call.1} parent=0
    _
  %s8 = ssub.s32 1, %s6
  %s9 = scalar_select 0, %s8, %s6
  $region1: #{tpu_custom_call.1} parent=0
    #allocation2 [shape = 'u8[49152]{0}', space=vmem, size = 0xc000, scoped, tag = 'input window, operand 0']
    #allocation3 [shape = 's32[2]{0}', space=sflag, size = 0x8, scoped, tag = 'scoped memory for tpu_custom_call.1']
    #allocation4 [shape = 's32[2]{0}', space=sflag, size = 0x8, scoped, tag = 'scoped memory for tpu_custom_call.1']
    #allocation5 [shape = 'u8[24576]{0}', space=vmem, size = 0x6000, scoped, tag = 'output window, operand 0']
    %10 = vsyncpa [#allocation3], 0
    %s11 = scalar_lea.sflag [#allocation3], 1
    %12 = vsyncpa %s11, 0
    %13 = vsyncpa [#allocation4], 0
    %s14 = scalar_lea.sflag [#allocation4], 1
    %15 = vsyncpa %s14, 0
    loop: start=0, step=1, limit=4
    $region2: #{tpu_custom_call.1} parent=1 // loop_pre_header
      _
    $region3: #{tpu_custom_call.1} parent=1 // loop_header
      %s17 = sphi 0, %s21
      %p18 = scmp.ge.s32.totalorder %s17, 4
      %s27 = sphi 0, %s29
      %s30 = sphi 0, %s27
      %s31 = sphi 0, %s30
      %s47 = sphi 0, %s31
      %s51 = sphi 0, %s51
      %s53 = sphi 0, %s51
      %s54 = sphi 0, %s53
      %s68 = sphi 0, %s54
      %s72 = sphi 0, %s72
      %s74 = sphi 0, %s72
      %s75 = sphi 0, %s74
      %s89 = sphi 0, %s75
      %s93 = sphi 0, %s93
      %s95 = sphi 0, %s93
      %s96 = sphi 0, %s95
      %s110 = sphi 0, %s96
      %s114 = sphi 0, %s114
      %s116 = sphi 0, %s114
      %s117 = sphi 0, %s116
      %s131 = sphi 0, %s117
      %s137 = sphi 0, %s139
      %s140 = sphi 0, %s137
      %s141 = sphi 0, %s140
      %s157 = sphi 0, %s141
    $region4: #{tpu_custom_call.1} parent=1 // loop_header_branch
      %20 = sbr.rel (%p18) target = $region8
    $region5: #{tpu_custom_call.1} parent=1 // loop_body
      %s22 = ssub.s32 %s17, 1
      %s23 = ssub.s32 %s17, 2
      %s24 = sadd.s32 %s17, 1
      %s25 = ssub.s32 %s17, %s24
      %p26 = scmp.eq.s32.totalorder %s25, 0
      %s28 = sadd.s32 %s27, 1
      %s29 = scalar_select %p26, %s27, %s28
      %p32 = pneg %p26
      %p33 = scmp.eq.s32.totalorder %s17, 1
      %p34 = por %p32, %p33
      %p35 = scmp.ne.s32.totalorder %s27, %s30
      %p36 = scmp.eq.s32.totalorder %s17, 0
      %p37 = por %p35, %p36
      %p38 = scmp.ne.s32.totalorder %s27, %s30
      %p39 = scmp.eq.s32.totalorder %s22, 1
      %p40 = por %p38, %p39
      %p41 = scmp.ne.s32.totalorder %s30, %s31
      %p42 = scmp.eq.s32.totalorder %s22, 0
      %p43 = por %p41, %p42
      %p44 = scmp.ne.s32.totalorder %s30, %s31
      %p45 = scmp.eq.s32.totalorder %s23, 1
      %p46 = por %p44, %p45
      %p48 = scmp.ne.s32.totalorder %s31, %s47
      %p49 = scmp.eq.s32.totalorder %s23, 0
      %p50 = por %p48, %p49
      %s52 = sadd.s32 %s51, 1
      %p55 = scmp.eq.s32.totalorder %s17, 1
      %p56 = scmp.ne.s32.totalorder %s51, %s53
      %p57 = scmp.eq.s32.totalorder %s17, 0
      %p58 = por %p56, %p57
      %p59 = scmp.ne.s32.totalorder %s51, %s53
      %p60 = scmp.eq.s32.totalorder %s22, 1
      %p61 = por %p59, %p60
      %p62 = scmp.ne.s32.totalorder %s53, %s54
      %p63 = scmp.eq.s32.totalorder %s22, 0
      %p64 = por %p62, %p63
      %p65 = scmp.ne.s32.totalorder %s53, %s54
      %p66 = scmp.eq.s32.totalorder %s23, 1
      %p67 = por %p65, %p66
      %p69 = scmp.ne.s32.totalorder %s54, %s68
      %p70 = scmp.eq.s32.totalorder %s23, 0
      %p71 = por %p69, %p70
      %s73 = sadd.s32 %s72, 1
      %p76 = scmp.eq.s32.totalorder %s17, 1
      %p77 = scmp.ne.s32.totalorder %s72, %s74
      %p78 = scmp.eq.s32.totalorder %s17, 0
      %p79 = por %p77, %p78
      %p80 = scmp.ne.s32.totalorder %s72, %s74
      %p81 = scmp.eq.s32.totalorder %s22, 1
      %p82 = por %p80, %p81
      %p83 = scmp.ne.s32.totalorder %s74, %s75
      %p84 = scmp.eq.s32.totalorder %s22, 0
      %p85 = por %p83, %p84
      %p86 = scmp.ne.s32.totalorder %s74, %s75
      %p87 = scmp.eq.s32.totalorder %s23, 1
      %p88 = por %p86, %p87
      %p90 = scmp.ne.s32.totalorder %s75, %s89
      %p91 = scmp.eq.s32.totalorder %s23, 0
      %p92 = por %p90, %p91
      %s94 = sadd.s32 %s93, 1
      %p97 = scmp.eq.s32.totalorder %s17, 1
      %p98 = scmp.ne.s32.totalorder %s93, %s95
      %p99 = scmp.eq.s32.totalorder %s17, 0
      %p100 = por %p98, %p99
      %p101 = scmp.ne.s32.totalorder %s93, %s95
      %p102 = scmp.eq.s32.totalorder %s22, 1
      %p103 = por %p101, %p102
      %p104 = scmp.ne.s32.totalorder %s95, %s96
      %p105 = scmp.eq.s32.totalorder %s22, 0
      %p106 = por %p104, %p105
      %p107 = scmp.ne.s32.totalorder %s95, %s96
      %p108 = scmp.eq.s32.totalorder %s23, 1
      %p109 = por %p107, %p108
      %p111 = scmp.ne.s32.totalorder %s96, %s110
      %p112 = scmp.eq.s32.totalorder %s23, 0
      %p113 = por %p111, %p112
      %s115 = sadd.s32 %s114, 1
      %p118 = scmp.eq.s32.totalorder %s17, 1
      %p119 = scmp.ne.s32.totalorder %s114, %s116
      %p120 = scmp.eq.s32.totalorder %s17, 0
      %p121 = por %p119, %p120
      %p122 = scmp.ne.s32.totalorder %s114, %s116
      %p123 = scmp.eq.s32.totalorder %s22, 1
      %p124 = por %p122, %p123
      %p125 = scmp.ne.s32.totalorder %s116, %s117
      %p126 = scmp.eq.s32.totalorder %s22, 0
      %p127 = por %p125, %p126
      %p128 = scmp.ne.s32.totalorder %s116, %s117
      %p129 = scmp.eq.s32.totalorder %s23, 1
      %p130 = por %p128, %p129
      %p132 = scmp.ne.s32.totalorder %s117, %s131
      %p133 = scmp.eq.s32.totalorder %s23, 0
      %p134 = por %p132, %p133
      %s135 = ssub.s32 %s17, %s24
      %p136 = scmp.eq.s32.totalorder %s135, 0
      %s138 = sadd.s32 %s137, 1
      %s139 = scalar_select %p136, %s137, %s138
      %p142 = pneg %p136
      %p143 = scmp.eq.s32.totalorder %s17, 1
      %p144 = por %p142, %p143
      %p145 = scmp.ne.s32.totalorder %s137, %s140
      %p146 = scmp.eq.s32.totalorder %s17, 0
      %p147 = por %p145, %p146
      %p148 = scmp.ne.s32.totalorder %s137, %s140
      %p149 = scmp.eq.s32.totalorder %s22, 1
      %p150 = por %p148, %p149
      %p151 = scmp.ne.s32.totalorder %s140, %s141
      %p152 = scmp.eq.s32.totalorder %s22, 0
      %p153 = por %p151, %p152
      %p154 = scmp.ne.s32.totalorder %s140, %s141
      %p155 = scmp.eq.s32.totalorder %s23, 1
      %p156 = por %p154, %p155
      %p158 = scmp.ne.s32.totalorder %s141, %s157
      %p159 = scmp.eq.s32.totalorder %s23, 0
      %p160 = por %p158, %p159
      %p161 = scmp.le.s32.totalorder 1, %s17
      %p162 = scmp.lt.s32.totalorder %s17, 3
      %p163 = pnand %p161, %p162
      %p164 = pneg %p163
      // Predicated region
      $region9: #{tpu_custom_call.1} parent=5 // pred_check
        _
      $region10: #{tpu_custom_call.1} parent=5 // pred_check_branch
        %166 = sbr.rel (%p163) target = $region12
      $region11: #{tpu_custom_call.1} parent=5 // pred_region
        %s167 = ssub.s32 %s17, 1
        // Predicated region
        $region13: #{tpu_custom_call.1} parent=11 // pred_check
          %p168 = pneg %p64
        $region14: #{tpu_custom_call.1} parent=11 // pred_check_branch
          %170 = sbr.rel (%p168) target = $region16
        $region15: #{tpu_custom_call.1} parent=11 // pred_region
          _
        $region16: #{tpu_custom_call.1} parent=11 // pred_fallthru
          _
        // Predicated region
        $region17: #{tpu_custom_call.1} parent=11 // pred_check
          %p171 = pneg %p85
        $region18: #{tpu_custom_call.1} parent=11 // pred_check_branch
          %173 = sbr.rel (%p171) target = $region20
        $region19: #{tpu_custom_call.1} parent=11 // pred_region
          _
        $region20: #{tpu_custom_call.1} parent=11 // pred_fallthru
          _
        // Predicated region
        $region21: #{tpu_custom_call.1} parent=11 // pred_check
          %p174 = pneg %p106
        $region22: #{tpu_custom_call.1} parent=11 // pred_check_branch
          %176 = sbr.rel (%p174) target = $region24
        $region23: #{tpu_custom_call.1} parent=11 // pred_region
          _
        $region24: #{tpu_custom_call.1} parent=11 // pred_fallthru
          _
        // Predicated region
        $region25: #{tpu_custom_call.1} parent=11 // pred_check
          %p177 = pneg %p127
        $region26: #{tpu_custom_call.1} parent=11 // pred_check_branch
          %179 = sbr.rel (%p177) target = $region28
        $region27: #{tpu_custom_call.1} parent=11 // pred_region
          _
        $region28: #{tpu_custom_call.1} parent=11 // pred_fallthru
          _
      $region12: #{tpu_custom_call.1} parent=5 // pred_fallthru
        _
      %p180 = scmp.lt.s32.totalorder %s17, 2
      // Predicated region
      $region29: #{tpu_custom_call.1} parent=5 // pred_check
        %p181 = pneg %p180
      $region30: #{tpu_custom_call.1} parent=5 // pred_check_branch
        %183 = sbr.rel (%p181) target = $region32
      $region31: #{tpu_custom_call.1} parent=5 // pred_region
        // Predicated region
        $region33: #{tpu_custom_call.1} parent=31 // pred_check
          %p184 = pneg %p37
        $region34: #{tpu_custom_call.1} parent=31 // pred_check_branch
          %186 = sbr.rel (%p184) target = $region36
        $region35: #{tpu_custom_call.1} parent=31 // pred_region
          %s187 = sand.u32 %s27, 1
          %s188 = scalar_lea.sflag [#allocation3], %s187
          %s189 = sand.u32 %s27, 1
          %s190 = smul.addr %s189, 48
          %s191 = scalar_lea.vmem [#allocation2], %s190
          %s192 = smul.u32 6, %s17
          %s194 = ssub.s32 768, 768
          %195 = vsyncadd %s188, %s194
          %s196 = smul.addr %s192, 64
          %s197 = scalar_lea.hbm %s0, %s196
          %s198 = sshll.u32 %s191, 4
          %s199 = int_to_ptr.vmem [resolvable:$true] %s198
          %204 = dma.hbm_to_vmem [thread:$0]  %s197, 768, %s199, %s188, 768, 384, 24
        $region36: #{tpu_custom_call.1} parent=31 // pred_fallthru
          _
      $region32: #{tpu_custom_call.1} parent=5 // pred_fallthru
        _
      %p205 = scmp.le.s32.totalorder 1, %s17
      %p206 = scmp.lt.s32.totalorder %s17, 3
      %p207 = pnand %p205, %p206
      %p208 = pneg %p207
      // Predicated region
      $region37: #{tpu_custom_call.1} parent=5 // pred_check
        _
      $region38: #{tpu_custom_call.1} parent=5 // pred_check_branch
        %210 = sbr.rel (%p207) target = $region40
      $region39: #{tpu_custom_call.1} parent=5 // pred_region
        %s211 = ssub.s32 %s17, 1
        %s212 = sand.u32 %s30, 1
        %s213 = scalar_lea.sflag [#allocation3], %s212
        %s214 = sand.u32 %s30, 1
        %s215 = smul.addr %s214, 48
        %s216 = scalar_lea.vmem [#allocation2], %s215
        // Predicated region
        $region41: #{tpu_custom_call.1} parent=39 // pred_check
          %p217 = pneg %p43
        $region42: #{tpu_custom_call.1} parent=39 // pred_check_branch
          %219 = sbr.rel (%p217) target = $region44
        $region43: #{tpu_custom_call.1} parent=39 // pred_region
          %220 = dma.done %s213, 768
        $region44: #{tpu_custom_call.1} parent=39 // pred_fallthru
          _
        %s221 = sand.u32 %s30, 1
        %s222 = scalar_lea.sflag [#allocation3], %s221
        %s223 = sand.u32 %s30, 1
        %s224 = smul.addr %s223, 48
        %s225 = scalar_lea.vmem [#allocation2], %s224
        %p226 = pneg %p43
        %p227 = pneg %p40
        %p228 = pneg %p64
        %p229 = pneg %p61
        %p230 = pneg %p85
        %p231 = pneg %p82
        %p232 = pneg %p106
        %p233 = pneg %p103
        %p234 = pneg %p127
        %p235 = pneg %p124
        %p236 = pneg %p153
        %p237 = pneg %p150
        %s238 = sand.u32 %s140, 1
        %s239 = scalar_lea.sflag [#allocation4], %s238
        %s240 = sand.u32 %s140, 1
        %s241 = smul.addr %s240, 24
        %s242 = scalar_lea.vmem [#allocation5], %s241
        %s243 = smul.u32 6, %s22
        %s244 = smul.u32 6, %s22
        %v246 = vld [vmem:[%s216] sm:$0xff]
        %v247 = vld [vmem:[%s216 + $0x8] sm:$0xff]
        %v248 = vld [vmem:[%s216 + $0x10] sm:$0xff]
        %v249 = vld [vmem:[%s216 + $0x18] sm:$0x11]
        %v250 = vld [vmem:[%s216 + $0x20] sm:$0x11]
        %v251 = vld [vmem:[%s216 + $0x28] sm:$0x11]
        %v252 = vld [vmem:[%s1] sm:$0xf]
        %v253 = vld [vmem:[%s1 + $0x4] sm:$0xf]
        %v254 = vld [vmem:[%s1 + $0x8] sm:$0xf]
        %v255 = vld [vmem:[%s1 + $0xc] sm:$0xf]
        %v256 = vld [vmem:[%s2] sm:$0xff]
        %v257 = vld [vmem:[%s2 + $0x8] sm:$0xff]
        %v258 = vld [vmem:[%s2 + $0x10] sm:$0xff]
        %v259 = vld [vmem:[%s2 + $0x18] sm:$0xff]
        %261 = vset.pattern.permute.xlu0 0
        %262 = vperm.xlu0 %261, %v256
        %v263 = vpop.permute.xlu0 %262
        %266 = vset.pattern.permute.xlu0 0
        %267 = vperm.xlu0 %266, %v257
        %v268 = vpop.permute.xlu0 %267
        %271 = vset.pattern.permute.xlu0 0
        %272 = vperm.xlu0 %271, %v258
        %v273 = vpop.permute.xlu0 %272
        %276 = vset.pattern.permute.xlu0 0
        %277 = vperm.xlu0 %276, %v259
        %v278 = vpop.permute.xlu0 %277
        %v284 = vunpack.c.l.b16 %v252
        %v285 = vunpack.c.l.b16 %v253
        %v286 = vunpack.c.l.b16 %v254
        %v287 = vunpack.c.l.b16 %v255
        %v288 = vpack.c.b16 %v285, %v284
        %v289 = vpack.c.b16 %v287, %v286
        %v296 = vunpack.c.l.b16 %v246
        %v297 = vunpack.c.h.b16 %v246
        %v298 = vunpack.c.l.b16 %v247
        %v299 = vunpack.c.h.b16 %v247
        %v300 = vunpack.c.l.b16 %v248
        %v301 = vunpack.c.h.b16 %v248
        %v302 = vunpack.c.l.b16 %v249
        %v303 = vunpack.c.h.b16 %v249
        %v304 = vunpack.c.l.b16 %v250
        %v305 = vunpack.c.h.b16 %v250
        %v306 = vunpack.c.l.b16 %v251
        %v307 = vunpack.c.h.b16 %v251
        %v308 = vpack.c.b16 %v302, %v296
        %v309 = vpack.c.b16 %v303, %v297
        %v310 = vpack.c.b16 %v304, %v298
        %v311 = vpack.c.b16 %v305, %v299
        %v312 = vpack.c.b16 %v306, %v300
        %v313 = vpack.c.b16 %v307, %v301
        %vm314 = vcmask 72704
        %v316 = vsel %vm314, %v288, 0
        %v319 = vsel %vm314, %v289, 0
        %vm321 = vcmask 1043456
        %vm322 = vcmask 1044480
        %v323 = vsel %vm321, 4294967295, 65535
        %v324 = vsel %vm322, %v323, 0
        %v326 = vand.u32 %v308, %v324
        %v329 = vand.u32 %v309, %v324
        %v332 = vand.u32 %v310, %v324
        %v335 = vand.u32 %v311, %v324
        %v338 = vand.u32 %v312, %v324
        %v341 = vand.u32 %v313, %v324
        %343 = vmatprep.subr.bf16.mxu0 %v329
        %344 = vmatpush1.bf16.msra.mxu0 %v326
        %345 = vmatprep.subr.bf16.mxu0 0
        %346 = vmatpush1.bf16.msra.mxu0 0
        %347 = vmatprep.subr.bf16.mxu0 0
        %348 = vmatpush1.bf16.msra.mxu0 0
        %349 = vmatprep.subr.bf16.mxu0 0
        %350 = vmatpush1.bf16.msra.mxu0 0
        %351 = vmatprep.subr.bf16.mxu0 0
        %352 = vmatpush1.bf16.msra.mxu0 0
        %353 = vmatprep.subr.bf16.mxu0 0
        %354 = vmatpush1.bf16.msra.mxu0 0
        %355 = vmatprep.subr.bf16.mxu0 0
        %356 = vmatpush1.bf16.msra.mxu0 0
        %357 = vmatprep.subr.bf16.mxu0 0
        %358 = vmatpush1.bf16.msra.mxu0 0
        %359 = vmatprep.subr.bf16.mxu0 0
        %360 = vmatpush1.bf16.msra.mxu0 0
        %361 = vmatprep.subr.bf16.mxu0 0
        %362 = vmatpush1.bf16.msra.mxu0 0
        %363 = vmatprep.subr.bf16.mxu0 0
        %364 = vmatpush1.bf16.msra.mxu0 0
        %365 = vmatprep.subr.bf16.mxu0 0
        %366 = vmatpush1.bf16.msra.mxu0 0
        %367 = vmatprep.subr.bf16.mxu0 0
        %368 = vmatpush1.bf16.msra.mxu0 0
        %369 = vmatprep.subr.bf16.mxu0 0
        %370 = vmatpush1.bf16.msra.mxu0 0
        %371 = vmatprep.subr.bf16.mxu0 0
        %372 = vmatpush1.bf16.msra.mxu0 0
        %373 = vmatprep.subr.bf16.mxu0 0
        %374 = vmatpush1.bf16.msra.mxu0 0
        %375 = vmatprep.mubr.bf16.mxu0 0
        %376 = vmatmul.mubr.bf16.gmra.mrb[0].mxu0 %v316
        %v377 = vpop.f32.mrb[0].mxu0
        %v378 = vadd.f32 %v263, %v377
        %v379 = vpop.f32.mrb[0].mxu0
        %v380 = vadd.f32 %v263, %v379
        %v381 = vpop.f32.mrb[0].mxu0
        %v382 = vadd.f32 %v268, %v381
        %v383 = vpop.f32.mrb[0].mxu0
        %v384 = vadd.f32 %v268, %v383
        %385 = vmatprep.mubr.bf16.mxu0 0
        %386 = vmatmul.mubr.bf16.gmra.mrb[0].mxu0 %v319
        %v387 = vpop.f32.mrb[0].mxu0
        %v388 = vadd.f32 %v273, %v387
        %v389 = vpop.f32.mrb[0].mxu0
        %v390 = vadd.f32 %v273, %v389
        %v391 = vpop.f32.mrb[0].mxu0
        %v392 = vadd.f32 %v278, %v391
        %v393 = vpop.f32.mrb[0].mxu0
        %v394 = vadd.f32 %v278, %v393
        %395 = vdwg.mxu0
        %396 = vmatprep.subr.bf16.mxu0 %v335
        %397 = vmatpush1.bf16.msra.mxu0 %v332
        %398 = vmatprep.subr.bf16.mxu0 0
        %399 = vmatpush1.bf16.msra.mxu0 0
        %400 = vmatprep.subr.bf16.mxu0 0
        %401 = vmatpush1.bf16.msra.mxu0 0
        %402 = vmatprep.subr.bf16.mxu0 0
        %403 = vmatpush1.bf16.msra.mxu0 0
        %404 = vmatprep.subr.bf16.mxu0 0
        %405 = vmatpush1.bf16.msra.mxu0 0
        %406 = vmatprep.subr.bf16.mxu0 0
        %407 = vmatpush1.bf16.msra.mxu0 0
        %408 = vmatprep.subr.bf16.mxu0 0
        %409 = vmatpush1.bf16.msra.mxu0 0
        %410 = vmatprep.subr.bf16.mxu0 0
        %411 = vmatpush1.bf16.msra.mxu0 0
        %412 = vmatprep.subr.bf16.mxu0 0
        %413 = vmatpush1.bf16.msra.mxu0 0
        %414 = vmatprep.subr.bf16.mxu0 0
        %415 = vmatpush1.bf16.msra.mxu0 0
        %416 = vmatprep.subr.bf16.mxu0 0
        %417 = vmatpush1.bf16.msra.mxu0 0
        %418 = vmatprep.subr.bf16.mxu0 0
        %419 = vmatpush1.bf16.msra.mxu0 0
        %420 = vmatprep.subr.bf16.mxu0 0
        %421 = vmatpush1.bf16.msra.mxu0 0
        %422 = vmatprep.subr.bf16.mxu0 0
        %423 = vmatpush1.bf16.msra.mxu0 0
        %424 = vmatprep.subr.bf16.mxu0 0
        %425 = vmatpush1.bf16.msra.mxu0 0
        %426 = vmatprep.subr.bf16.mxu0 0
        %427 = vmatpush1.bf16.msra.mxu0 0
        %428 = vmatprep.mubr.bf16.mxu0 0
        %429 = vmatmul.mubr.bf16.gmra.mrb[0].mxu0 %v316
        %v430 = vpop.f32.mrb[0].mxu0
        %v431 = vadd.f32 %v263, %v430
        %v432 = vpop.f32.mrb[0].mxu0
        %v433 = vadd.f32 %v263, %v432
        %v434 = vpop.f32.mrb[0].mxu0
        %v435 = vadd.f32 %v268, %v434
        %v436 = vpop.f32.mrb[0].mxu0
        %v437 = vadd.f32 %v268, %v436
        %438 = vmatprep.mubr.bf16.mxu0 0
        %439 = vmatmul.mubr.bf16.gmra.mrb[0].mxu0 %v319
        %v440 = vpop.f32.mrb[0].mxu0
        %v441 = vadd.f32 %v273, %v440
        %v442 = vpop.f32.mrb[0].mxu0
        %v443 = vadd.f32 %v273, %v442
        %v444 = vpop.f32.mrb[0].mxu0
        %v445 = vadd.f32 %v278, %v444
        %v446 = vpop.f32.mrb[0].mxu0
        %v447 = vadd.f32 %v278, %v446
        %448 = vdwg.mxu0
        %449 = vmatprep.subr.bf16.mxu0 %v341
        %450 = vmatpush1.bf16.msra.mxu0 %v338
        %451 = vmatprep.subr.bf16.mxu0 0
        %452 = vmatpush1.bf16.msra.mxu0 0
        %453 = vmatprep.subr.bf16.mxu0 0
        %454 = vmatpush1.bf16.msra.mxu0 0
        %455 = vmatprep.subr.bf16.mxu0 0
        %456 = vmatpush1.bf16.msra.mxu0 0
        %457 = vmatprep.subr.bf16.mxu0 0
        %458 = vmatpush1.bf16.msra.mxu0 0
        %459 = vmatprep.subr.bf16.mxu0 0
        %460 = vmatpush1.bf16.msra.mxu0 0
        %461 = vmatprep.subr.bf16.mxu0 0
        %462 = vmatpush1.bf16.msra.mxu0 0
        %463 = vmatprep.subr.bf16.mxu0 0
        %464 = vmatpush1.bf16.msra.mxu0 0
        %465 = vmatprep.subr.bf16.mxu0 0
        %466 = vmatpush1.bf16.msra.mxu0 0
        %467 = vmatprep.subr.bf16.mxu0 0
        %468 = vmatpush1.bf16.msra.mxu0 0
        %469 = vmatprep.subr.bf16.mxu0 0
        %470 = vmatpush1.bf16.msra.mxu0 0
        %471 = vmatprep.subr.bf16.mxu0 0
        %472 = vmatpush1.bf16.msra.mxu0 0
        %473 = vmatprep.subr.bf16.mxu0 0
        %474 = vmatpush1.bf16.msra.mxu0 0
        %475 = vmatprep.subr.bf16.mxu0 0
        %476 = vmatpush1.bf16.msra.mxu0 0
        %477 = vmatprep.subr.bf16.mxu0 0
        %478 = vmatpush1.bf16.msra.mxu0 0
        %479 = vmatprep.subr.bf16.mxu0 0
        %480 = vmatpush1.bf16.msra.mxu0 0
        %481 = vmatprep.mubr.bf16.mxu0 0
        %482 = vmatmul.mubr.bf16.gmra.mrb[0].mxu0 %v316
        %v483 = vpop.f32.mrb[0].mxu0
        %v484 = vadd.f32 %v263, %v483
        %v485 = vpop.f32.mrb[0].mxu0
        %v486 = vadd.f32 %v263, %v485
        %v487 = vpop.f32.mrb[0].mxu0
        %v488 = vadd.f32 %v268, %v487
        %v489 = vpop.f32.mrb[0].mxu0
        %v490 = vadd.f32 %v268, %v489
        %491 = vmatprep.mubr.bf16.mxu0 0
        %492 = vmatmul.mubr.bf16.gmra.mrb[0].mxu0 %v319
        %v493 = vpop.f32.mrb[0].mxu0
        %v494 = vadd.f32 %v273, %v493
        %v495 = vpop.f32.mrb[0].mxu0
        %v496 = vadd.f32 %v273, %v495
        %v497 = vpop.f32.mrb[0].mxu0
        %v498 = vadd.f32 %v278, %v497
        %v499 = vpop.f32.mrb[0].mxu0
        %v500 = vadd.f32 %v278, %v499
        %501 = vdwg.mxu0
        %v502 = vmax.f32 %v378, 0.0
        %v503 = vmax.f32 %v380, 0.0
        %v504 = vmax.f32 %v431, 0.0
        %v505 = vmax.f32 %v433, 0.0
        %v506 = vmax.f32 %v484, 0.0
        %v507 = vmax.f32 %v486, 0.0
        %v508 = vmax.f32 %v382, 0.0
        %v509 = vmax.f32 %v384, 0.0
        %v510 = vmax.f32 %v435, 0.0
        %v511 = vmax.f32 %v437, 0.0
        %v512 = vmax.f32 %v488, 0.0
        %v513 = vmax.f32 %v490, 0.0
        %v514 = vmax.f32 %v388, 0.0
        %v515 = vmax.f32 %v390, 0.0
        %v516 = vmax.f32 %v441, 0.0
        %v517 = vmax.f32 %v443, 0.0
        %v518 = vmax.f32 %v494, 0.0
        %v519 = vmax.f32 %v496, 0.0
        %v520 = vmax.f32 %v392, 0.0
        %v521 = vmax.f32 %v394, 0.0
        %v522 = vmax.f32 %v445, 0.0
        %v523 = vmax.f32 %v447, 0.0
        %v524 = vmax.f32 %v498, 0.0
        %v525 = vmax.f32 %v500, 0.0
        %v526 = vld [vmem:[%s3] sm:$0x3]
        %v527 = vpack.c.bf16 %v508, %v502
        %v528 = vpack.c.bf16 %v509, %v503
        %v529 = vpack.c.bf16 %v510, %v504
        %v530 = vpack.c.bf16 %v511, %v505
        %v531 = vpack.c.bf16 %v512, %v506
        %v532 = vpack.c.bf16 %v513, %v507
        %v533 = vpack.c.bf16 %v520, %v514
        %v534 = vpack.c.bf16 %v521, %v515
        %v535 = vpack.c.bf16 %v522, %v516
        %v536 = vpack.c.bf16 %v523, %v517
        %v537 = vpack.c.bf16 %v524, %v518
        %v538 = vpack.c.bf16 %v525, %v519
        %v539 = vld [vmem:[%s4] sm:$0xf]
        %541 = vset.pattern.permute.xlu0 0
        %542 = vperm.xlu0 %541, %v539
        %v543 = vpop.permute.xlu0 %542
        %vm545 = vcmask 261120
        %v547 = vsel %vm545, %v526, 0
        %549 = vmatprep.subr.bf16.mxu0 %v528
        %550 = vmatpush1.bf16.msra.mxu0 %v527
        %551 = vmatprep.subr.bf16.mxu0 %v534
        %552 = vmatpush1.bf16.msra.mxu0 %v533
        %553 = vmatprep.subr.bf16.mxu0 0
        %554 = vmatpush1.bf16.msra.mxu0 0
        %555 = vmatprep.subr.bf16.mxu0 0
        %556 = vmatpush1.bf16.msra.mxu0 0
        %557 = vmatprep.subr.bf16.mxu0 0
        %558 = vmatpush1.bf16.msra.mxu0 0
        %559 = vmatprep.subr.bf16.mxu0 0
        %560 = vmatpush1.bf16.msra.mxu0 0
        %561 = vmatprep.subr.bf16.mxu0 0
        %562 = vmatpush1.bf16.msra.mxu0 0
        %563 = vmatprep.subr.bf16.mxu0 0
        %564 = vmatpush1.bf16.msra.mxu0 0
        %565 = vmatprep.subr.bf16.mxu0 0
        %566 = vmatpush1.bf16.msra.mxu0 0
        %567 = vmatprep.subr.bf16.mxu0 0
        %568 = vmatpush1.bf16.msra.mxu0 0
        %569 = vmatprep.subr.bf16.mxu0 0
        %570 = vmatpush1.bf16.msra.mxu0 0
        %571 = vmatprep.subr.bf16.mxu0 0
        %572 = vmatpush1.bf16.msra.mxu0 0
        %573 = vmatprep.subr.bf16.mxu0 0
        %574 = vmatpush1.bf16.msra.mxu0 0
        %575 = vmatprep.subr.bf16.mxu0 0
        %576 = vmatpush1.bf16.msra.mxu0 0
        %577 = vmatprep.subr.bf16.mxu0 0
        %578 = vmatpush1.bf16.msra.mxu0 0
        %579 = vmatprep.subr.bf16.mxu0 0
        %580 = vmatpush1.bf16.msra.mxu0 0
        %581 = vmatprep.mubr.bf16.mxu0 0
        %582 = vmatmul.mubr.bf16.gmra.mrb[0].mxu0 %v547
        %v583 = vpop.f32.mrb[0].mxu0
        %v584 = vadd.f32 %v543, %v583
        %v585 = vpop.f32.mrb[0].mxu0
        %v586 = vadd.f32 %v543, %v585
        %v587 = vpop.f32.mrb[0].mxu0
        %v588 = vpop.f32.mrb[0].mxu0
        %589 = vdwg.mxu0
        %590 = vmatprep.subr.bf16.mxu0 %v530
        %591 = vmatpush1.bf16.msra.mxu0 %v529
        %592 = vmatprep.subr.bf16.mxu0 %v536
        %593 = vmatpush1.bf16.msra.mxu0 %v535
        %594 = vmatprep.subr.bf16.mxu0 0
        %595 = vmatpush1.bf16.msra.mxu0 0
        %596 = vmatprep.subr.bf16.mxu0 0
        %597 = vmatpush1.bf16.msra.mxu0 0
        %598 = vmatprep.subr.bf16.mxu0 0
        %599 = vmatpush1.bf16.msra.mxu0 0
        %600 = vmatprep.subr.bf16.mxu0 0
        %601 = vmatpush1.bf16.msra.mxu0 0
        %602 = vmatprep.subr.bf16.mxu0 0
        %603 = vmatpush1.bf16.msra.mxu0 0
        %604 = vmatprep.subr.bf16.mxu0 0
        %605 = vmatpush1.bf16.msra.mxu0 0
        %606 = vmatprep.subr.bf16.mxu0 0
        %607 = vmatpush1.bf16.msra.mxu0 0
        %608 = vmatprep.subr.bf16.mxu0 0
        %609 = vmatpush1.bf16.msra.mxu0 0
        %610 = vmatprep.subr.bf16.mxu0 0
        %611 = vmatpush1.bf16.msra.mxu0 0
        %612 = vmatprep.subr.bf16.mxu0 0
        %613 = vmatpush1.bf16.msra.mxu0 0
        %614 = vmatprep.subr.bf16.mxu0 0
        %615 = vmatpush1.bf16.msra.mxu0 0
        %616 = vmatprep.subr.bf16.mxu0 0
        %617 = vmatpush1.bf16.msra.mxu0 0
        %618 = vmatprep.subr.bf16.mxu0 0
        %619 = vmatpush1.bf16.msra.mxu0 0
        %620 = vmatprep.subr.bf16.mxu0 0
        %621 = vmatpush1.bf16.msra.mxu0 0
        %622 = vmatprep.mubr.bf16.mxu0 0
        %623 = vmatmul.mubr.bf16.gmra.mrb[0].mxu0 %v547
        %v624 = vpop.f32.mrb[0].mxu0
        %v625 = vadd.f32 %v543, %v624
        %v626 = vpop.f32.mrb[0].mxu0
        %v627 = vadd.f32 %v543, %v626
        %v628 = vpop.f32.mrb[0].mxu0
        %v629 = vpop.f32.mrb[0].mxu0
        %630 = vdwg.mxu0
        %631 = vmatprep.subr.bf16.mxu0 %v532
        %632 = vmatpush1.bf16.msra.mxu0 %v531
        %633 = vmatprep.subr.bf16.mxu0 %v538
        %634 = vmatpush1.bf16.msra.mxu0 %v537
        %635 = vmatprep.subr.bf16.mxu0 0
        %636 = vmatpush1.bf16.msra.mxu0 0
        %637 = vmatprep.subr.bf16.mxu0 0
        %638 = vmatpush1.bf16.msra.mxu0 0
        %639 = vmatprep.subr.bf16.mxu0 0
        %640 = vmatpush1.bf16.msra.mxu0 0
        %641 = vmatprep.subr.bf16.mxu0 0
        %642 = vmatpush1.bf16.msra.mxu0 0
        %643 = vmatprep.subr.bf16.mxu0 0
        %644 = vmatpush1.bf16.msra.mxu0 0
        %645 = vmatprep.subr.bf16.mxu0 0
        %646 = vmatpush1.bf16.msra.mxu0 0
        %647 = vmatprep.subr.bf16.mxu0 0
        %648 = vmatpush1.bf16.msra.mxu0 0
        %649 = vmatprep.subr.bf16.mxu0 0
        %650 = vmatpush1.bf16.msra.mxu0 0
        %651 = vmatprep.subr.bf16.mxu0 0
        %652 = vmatpush1.bf16.msra.mxu0 0
        %653 = vmatprep.subr.bf16.mxu0 0
        %654 = vmatpush1.bf16.msra.mxu0 0
        %655 = vmatprep.subr.bf16.mxu0 0
        %656 = vmatpush1.bf16.msra.mxu0 0
        %657 = vmatprep.subr.bf16.mxu0 0
        %658 = vmatpush1.bf16.msra.mxu0 0
        %659 = vmatprep.subr.bf16.mxu0 0
        %660 = vmatpush1.bf16.msra.mxu0 0
        %661 = vmatprep.subr.bf16.mxu0 0
        %662 = vmatpush1.bf16.msra.mxu0 0
        %663 = vmatprep.mubr.bf16.mxu0 0
        %664 = vmatmul.mubr.bf16.gmra.mrb[0].mxu0 %v547
        %v665 = vpop.f32.mrb[0].mxu0
        %v666 = vadd.f32 %v543, %v665
        %v667 = vpop.f32.mrb[0].mxu0
        %v668 = vadd.f32 %v543, %v667
        %v669 = vpop.f32.mrb[0].mxu0
        %v670 = vpop.f32.mrb[0].mxu0
        %671 = vdwg.mxu0
        %v678 = vcombine.low %v584, %v586
        %v679 = vcombine.low %v625, %v627
        %v680 = vcombine.low %v666, %v668
        %684 = vst [vmem:[%s242] sm:$0xff] %v678
        %685 = vst [vmem:[%s242 + $0x8] sm:$0xff] %v679
        %686 = vst [vmem:[%s242 + $0x10] sm:$0xff] %v680
        %s687 = sand.u32 %s140, 1
        %s688 = scalar_lea.sflag [#allocation4], %s687
        %s689 = sand.u32 %s140, 1
        %s690 = smul.addr %s689, 24
        %s691 = scalar_lea.vmem [#allocation5], %s690
        // Predicated region
        $region45: #{tpu_custom_call.1} parent=39 // pred_check
          %p692 = pneg %p150
        $region46: #{tpu_custom_call.1} parent=39 // pred_check_branch
          %694 = sbr.rel (%p692) target = $region48
        $region47: #{tpu_custom_call.1} parent=39 // pred_region
          %s695 = smul.u32 6, %s22
          %s697 = ssub.s32 384, 384
          %698 = vsyncadd %s688, %s697
          %s699 = smul.addr %s695, 64
          %s700 = scalar_lea.hbm %s5, %s699
          %s702 = sshll.u32 %s691, 4
          %s703 = int_to_ptr.vmem [resolvable:$true] %s702
          %705 = dma.vmem_to_hbm [thread:$0]  %s703, 384, %s700, %s688
        $region48: #{tpu_custom_call.1} parent=39 // pred_fallthru
          _
      $region40: #{tpu_custom_call.1} parent=5 // pred_fallthru
        _
      %p706 = scmp.le.s32.totalorder 2, %s17
      // Predicated region
      $region49: #{tpu_custom_call.1} parent=5 // pred_check
        %p707 = pneg %p706
      $region50: #{tpu_custom_call.1} parent=5 // pred_check_branch
        %709 = sbr.rel (%p707) target = $region52
      $region51: #{tpu_custom_call.1} parent=5 // pred_region
        %s710 = ssub.s32 %s17, 2
        // Predicated region
        $region53: #{tpu_custom_call.1} parent=51 // pred_check
          %p711 = pneg %p156
        $region54: #{tpu_custom_call.1} parent=51 // pred_check_branch
          %713 = sbr.rel (%p711) target = $region56
        $region55: #{tpu_custom_call.1} parent=51 // pred_region
          %s714 = sand.u32 %s141, 1
          %s715 = scalar_lea.sflag [#allocation4], %s714
          %s716 = sand.u32 %s141, 1
          %s717 = smul.addr %s716, 24
          %s718 = scalar_lea.vmem [#allocation5], %s717
          %719 = dma.done %s715, 384
        $region56: #{tpu_custom_call.1} parent=51 // pred_fallthru
          _
      $region52: #{tpu_custom_call.1} parent=5 // pred_fallthru
        _
    $region6: #{tpu_custom_call.1} parent=1 // loop_footer
      %s21 = sadd.s32 1, %s17
    $region7: #{tpu_custom_call.1} parent=1 // loop_footer_branch
      %16 = sbr.rel target = $region3
    $region8: #{tpu_custom_call.1} parent=1 // loop_exit
      _
    %720 = vsyncpa [#allocation3], 1
    %s721 = scalar_lea.sflag [#allocation3], 1
    %722 = vsyncpa %s721, 1
    %723 = vsyncpa [#allocation4], 1
    %s724 = scalar_lea.sflag [#allocation4], 1
    %725 = vsyncpa %s724, 1

</llo_original>
